<compile_context>
chip_gen: v7x
topology: tpu7x:2x2x1
jax: 0.10.0
libtpu: 0.0.40
codegen_flags: <defaults>
</compile_context>

<pallas_src>
import functools

import jax
import jax.numpy as jnp
from jax.experimental import pallas as pl
from jax.experimental.pallas import tpu as pltpu

_LANE = 128
_SUBLANE = 8


def _round_up(x, m):
    return (x + m - 1) // m * m


def _deep_cbow_kernel(ids_ref, tab_ref, w1_ref, w2_ref, w3_ref, bias_ref,
                      out_ref):
    """One batch tile of DeepCBOW.

    ids_ref  : (TB, S)   int32 token ids (padded batch rows hold id 0)
    tab_ref  : (Vp, Ep)  zero-padded embedding table (f32 or bf16)
    wX_ref   : zero-padded (in, out) weights (same dtype as table)
    bias_ref : (8, NB)   f32; rows 0/1/2 = b1/b2/b3 (zero-padded lanes)
    out_ref  : (TB, Op)  f32 padded logits
    """
    ids = ids_ref[...]                                        # (TB, S) int32
    tb, seq = ids.shape
    vp = tab_ref.shape[0]
    hp = w1_ref.shape[1]
    op = w3_ref.shape[1]
    mm_dtype = tab_ref.dtype

    # Fused embedding gather + bag-of-words sum as one MXU matmul:
    #   x[b] = sum_s table[ids[b, s]] = counts[b, :] @ table
    # counts is accumulated position-by-position; only a 2-D (TB, Vp)
    # accumulator is ever live (no (TB, S, Vp) intermediate).
    lane_iota = jax.lax.broadcasted_iota(jnp.int32, (tb, vp), 1)   # (TB, Vp)
    counts = jnp.zeros((tb, vp), mm_dtype)
    for s in range(seq):                       # S is small & static -> unroll
        counts = counts + (ids[:, s:s + 1] == lane_iota).astype(mm_dtype)

    def mm(a, b):
        # Weights are already in the matmul dtype (pre-cast once in the
        # wrapper); only the f32 activations get cast when bf16 is enabled.
        return jnp.dot(a.astype(b.dtype), b, preferred_element_type=jnp.float32)

    b1 = bias_ref[0:1, :hp]
    b2 = bias_ref[1:2, :hp]
    b3 = bias_ref[2:3, :op]

    x = mm(counts, tab_ref[...])                              # (TB, Ep) f32
    h1 = jnp.tanh(mm(x, w1_ref[...]) + b1)                    # (TB, Hp)
    h2 = jnp.tanh(mm(h1, w2_ref[...]) + b2)                   # (TB, Hp)
    logits = mm(h2, w3_ref[...]) + b3                         # (TB, Op)
    out_ref[...] = logits.astype(out_ref.dtype)


def prepare_params(embed_table, w1, b1, w2, b2, w3, b3,
                   *, use_bf16_matmul=False):
    """One-time padding / casting of parameters (hoisted out of the forward).

    Weights stored (in, out); biases (1, out). Zero padding keeps padded
    lanes inert (tanh(0) = 0); real logits are sliced out in the wrapper.
    """
    V, E = embed_table.shape
    H = w1.shape[1]
    O = w3.shape[1]
    Vp, Ep, Hp, Op = (_round_up(d, _LANE) for d in (V, E, H, O))
    NB = max(Hp, Op)

    f32 = jnp.float32
    mmd = jnp.bfloat16 if use_bf16_matmul else f32

    tab_p = jnp.zeros((Vp, Ep), f32).at[:V, :E].set(embed_table).astype(mmd)
    w1p = jnp.zeros((Ep, Hp), f32).at[:E, :H].set(w1).astype(mmd)
    w2p = jnp.zeros((Hp, Hp), f32).at[:H, :H].set(w2).astype(mmd)
    w3p = jnp.zeros((Hp, Op), f32).at[:H, :O].set(w3).astype(mmd)
    # Biases stay f32 (added to the f32 accumulator) and are stacked into a
    # single sublane-padded (8, NB) array: rows 0/1/2 = b1/b2/b3.
    bias_p = (jnp.zeros((_SUBLANE, NB), f32)
              .at[0, :H].set(b1.reshape(-1))
              .at[1, :H].set(b2.reshape(-1))
              .at[2, :O].set(b3.reshape(-1)))

    prepared = (tab_p, w1p, w2p, w3p, bias_p)
    dims = (V, E, H, O)
    return prepared, dims


def deep_cbow_forward(inputs, prepared, dims, *, block_b=512):
    """inputs: (B, S) int32 token ids; prepared/dims from prepare_params()."""
    tab_p, w1p, w2p, w3p, bias_p = prepared
    V, E, H, O = dims
    Vp, Ep = tab_p.shape
    Hp = w1p.shape[1]
    Op = w3p.shape[1]
    NBr, NB = bias_p.shape
    B, S = inputs.shape

    # Batch tiling: pad to a sublane multiple; pick the largest tile <= block_b
    # but ensure >= 2 grid steps whenever the batch exceeds one tile so v7x's
    # two TensorCores both get work under the "parallel" annotation.
    Bp0 = _round_up(B, _SUBLANE)
    TB = min(block_b, max(_SUBLANE, _round_up(pl.cdiv(Bp0, 2), _SUBLANE)))
    Bp = _round_up(Bp0, TB)
    ids_p = jnp.zeros((Bp, S), jnp.int32).at[:B, :].set(inputs)

    const2d = lambda i: (0, 0)   # weights/table/bias stay VMEM-resident

    itemsize = tab_p.dtype.itemsize
    flops = 2 * Bp * (Vp * Ep + Ep * Hp + Hp * Hp + Hp * Op) + Bp * S * Vp
    bytes_accessed = (ids_p.size * 4
                      + (tab_p.size + w1p.size + w2p.size + w3p.size) * itemsize
                      + bias_p.size * 4 + Bp * Op * 4)

    out_p = pl.pallas_call(
        _deep_cbow_kernel,
        out_shape=jax.ShapeDtypeStruct((Bp, Op), jnp.float32),
        grid=(Bp // TB,),
        in_specs=[
            pl.BlockSpec((TB, S), lambda i: (i, 0)),     # token ids per tile
            pl.BlockSpec((Vp, Ep), const2d),             # embedding table
            pl.BlockSpec((Ep, Hp), const2d),
            pl.BlockSpec((Hp, Hp), const2d),
            pl.BlockSpec((Hp, Op), const2d),
            pl.BlockSpec((NBr, NB), const2d),            # stacked biases
        ],
        out_specs=pl.BlockSpec((TB, Op), lambda i: (i, 0)),
        compiler_params=pltpu.CompilerParams(
            dimension_semantics=("parallel",)),          # megacore split (v7x)
        cost_estimate=pl.CostEstimate(
            flops=flops, transcendentals=2 * Bp * Hp,
            bytes_accessed=bytes_accessed),
    )(ids_p, tab_p, w1p, w2p, w3p, bias_p)

    return out_p[:B, :O]


def _init_params(key, vocab_size, embedding_dim, output_dim, hidden=100):
    ks = jax.random.split(key, 7)
    # Embedding ~ N(0, 1) (PyTorch default for nn.Embedding).
    embed_table = jax.random.normal(ks[0], (vocab_size, embedding_dim),
                                    jnp.float32)

    def linear(kw, kb, fan_in, fan_out):
        bound = 1.0 / jnp.sqrt(fan_in)
        # stored as (in, out) -- transpose of PyTorch nn.Linear weight
        w = jax.random.uniform(kw, (fan_in, fan_out), jnp.float32,
                               -bound, bound)
        b = jax.random.uniform(kb, (1, fan_out), jnp.float32, -bound, bound)
        return w, b

    w1, b1 = linear(ks[1], ks[2], embedding_dim, hidden)
    w2, b2 = linear(ks[3], ks[4], hidden, hidden)
    w3, b3 = linear(ks[5], ks[6], hidden, output_dim)
    return embed_table, w1, b1, w2, b2, w3, b3


if __name__ == "__main__":
    key = jax.random.PRNGKey(0)
    k_par, k_inp = jax.random.split(key)

    vocab_size = 50
    embedding_dim = 32
    output_dim = 5
    batch, seq = 2, 8

    params = _init_params(k_par, vocab_size, embedding_dim, output_dim)
    inputs = jax.random.randint(k_inp, (batch, seq), 0, vocab_size,
                                dtype=jnp.int32)

    # One-time parameter prep (padding hoisted out of the per-call path).
    # Keep f32 matmuls by default (required on v5e; keeps the 1e-4 check).
    prepared, dims = prepare_params(*params, use_bf16_matmul=False)

    logits = deep_cbow_forward(inputs, prepared, dims)
    jax.block_until_ready(logits)

    # Pure-JAX reference (explicit gather + sum + MLP).
    embed_table, w1, b1, w2, b2, w3, b3 = params
    x_ref = embed_table[inputs].sum(axis=1)
    h1 = jnp.tanh(x_ref @ w1 + b1)
    h2 = jnp.tanh(h1 @ w2 + b2)
    ref = h2 @ w3 + b3

    assert logits.shape == (batch, output_dim)
    assert jnp.allclose(logits, ref, atol=1e-4, rtol=1e-4), (
        f"max abs err {jnp.max(jnp.abs(logits - ref))}")

    print("KERNEL_OK")
</pallas_src>

<mosaic_0001>
module attributes {stable_mosaic.version = 11 : i64} {
  func.func @_deep_cbow_kernel(%arg0: i32, %arg1: memref<8x8xi32, #tpu.memory_space<vmem>>, %arg2: memref<128x128xf32, #tpu.memory_space<vmem>>, %arg3: memref<128x128xf32, #tpu.memory_space<vmem>>, %arg4: memref<128x128xf32, #tpu.memory_space<vmem>>, %arg5: memref<128x128xf32, #tpu.memory_space<vmem>>, %arg6: memref<8x128xf32, #tpu.memory_space<vmem>>, %arg7: memref<8x128xf32, #tpu.memory_space<vmem>>) attributes {dimension_semantics = [#tpu.dimension_semantics<parallel>], iteration_bounds = array<i64: 1>, scalar_prefetch = 0 : i64, scratch_operands = 0 : i64, tpu.core_type = #tpu.core_type<tc>, window_params = [{transform_indices = @transform_0, window_bounds = array<i64: 8, 8>}, {pipeline_mode = #tpu.pipeline_mode<synchronous>, transform_indices = @transform_1, window_bounds = array<i64: 128, 128>}, {pipeline_mode = #tpu.pipeline_mode<synchronous>, transform_indices = @transform_2, window_bounds = array<i64: 128, 128>}, {pipeline_mode = #tpu.pipeline_mode<synchronous>, transform_indices = @transform_3, window_bounds = array<i64: 128, 128>}, {pipeline_mode = #tpu.pipeline_mode<synchronous>, transform_indices = @transform_4, window_bounds = array<i64: 128, 128>}, {pipeline_mode = #tpu.pipeline_mode<synchronous>, transform_indices = @transform_5, window_bounds = array<i64: 8, 128>}, {transform_indices = @transform_6, window_bounds = array<i64: 8, 128>}]} {
    %c0 = arith.constant 0 : index
    %c0_0 = arith.constant 0 : index
    %0 = vector.load %arg1[%c0, %c0_0] : memref<8x8xi32, #tpu.memory_space<vmem>>, vector<8x8xi32>
    %1 = tpu.iota {dimensions = array<i32: 1>} : vector<8x128xi32>
    %cst = arith.constant 0.000000e+00 : f32
    %2 = vector.broadcast %cst : f32 to vector<8x128xf32>
    %3 = vector.extract_strided_slice %0 {offsets = [0, 0], sizes = [8, 1], strides = [1, 1]} : vector<8x8xi32> to vector<8x1xi32>
    %4 = vector.broadcast %3 : vector<8x1xi32> to vector<8x128xi32>
    %5 = arith.cmpi eq, %4, %1 : vector<8x128xi32>
    %6 = arith.extui %5 : vector<8x128xi1> to vector<8x128xi32>
    %7 = arith.sitofp %6 : vector<8x128xi32> to vector<8x128xf32>
    %8 = arith.addf %2, %7 : vector<8x128xf32>
    %9 = vector.extract_strided_slice %0 {offsets = [0, 1], sizes = [8, 1], strides = [1, 1]} : vector<8x8xi32> to vector<8x1xi32>
    %10 = vector.broadcast %9 : vector<8x1xi32> to vector<8x128xi32>
    %11 = arith.cmpi eq, %10, %1 : vector<8x128xi32>
    %12 = arith.extui %11 : vector<8x128xi1> to vector<8x128xi32>
    %13 = arith.sitofp %12 : vector<8x128xi32> to vector<8x128xf32>
    %14 = arith.addf %8, %13 : vector<8x128xf32>
    %15 = vector.extract_strided_slice %0 {offsets = [0, 2], sizes = [8, 1], strides = [1, 1]} : vector<8x8xi32> to vector<8x1xi32>
    %16 = vector.broadcast %15 : vector<8x1xi32> to vector<8x128xi32>
    %17 = arith.cmpi eq, %16, %1 : vector<8x128xi32>
    %18 = arith.extui %17 : vector<8x128xi1> to vector<8x128xi32>
    %19 = arith.sitofp %18 : vector<8x128xi32> to vector<8x128xf32>
    %20 = arith.addf %14, %19 : vector<8x128xf32>
    %21 = vector.extract_strided_slice %0 {offsets = [0, 3], sizes = [8, 1], strides = [1, 1]} : vector<8x8xi32> to vector<8x1xi32>
    %22 = vector.broadcast %21 : vector<8x1xi32> to vector<8x128xi32>
    %23 = arith.cmpi eq, %22, %1 : vector<8x128xi32>
    %24 = arith.extui %23 : vector<8x128xi1> to vector<8x128xi32>
    %25 = arith.sitofp %24 : vector<8x128xi32> to vector<8x128xf32>
    %26 = arith.addf %20, %25 : vector<8x128xf32>
    %27 = vector.extract_strided_slice %0 {offsets = [0, 4], sizes = [8, 1], strides = [1, 1]} : vector<8x8xi32> to vector<8x1xi32>
    %28 = vector.broadcast %27 : vector<8x1xi32> to vector<8x128xi32>
    %29 = arith.cmpi eq, %28, %1 : vector<8x128xi32>
    %30 = arith.extui %29 : vector<8x128xi1> to vector<8x128xi32>
    %31 = arith.sitofp %30 : vector<8x128xi32> to vector<8x128xf32>
    %32 = arith.addf %26, %31 : vector<8x128xf32>
    %33 = vector.extract_strided_slice %0 {offsets = [0, 5], sizes = [8, 1], strides = [1, 1]} : vector<8x8xi32> to vector<8x1xi32>
    %34 = vector.broadcast %33 : vector<8x1xi32> to vector<8x128xi32>
    %35 = arith.cmpi eq, %34, %1 : vector<8x128xi32>
    %36 = arith.extui %35 : vector<8x128xi1> to vector<8x128xi32>
    %37 = arith.sitofp %36 : vector<8x128xi32> to vector<8x128xf32>
    %38 = arith.addf %32, %37 : vector<8x128xf32>
    %39 = vector.extract_strided_slice %0 {offsets = [0, 6], sizes = [8, 1], strides = [1, 1]} : vector<8x8xi32> to vector<8x1xi32>
    %40 = vector.broadcast %39 : vector<8x1xi32> to vector<8x128xi32>
    %41 = arith.cmpi eq, %40, %1 : vector<8x128xi32>
    %42 = arith.extui %41 : vector<8x128xi1> to vector<8x128xi32>
    %43 = arith.sitofp %42 : vector<8x128xi32> to vector<8x128xf32>
    %44 = arith.addf %38, %43 : vector<8x128xf32>
    %45 = vector.extract_strided_slice %0 {offsets = [0, 7], sizes = [8, 1], strides = [1, 1]} : vector<8x8xi32> to vector<8x1xi32>
    %46 = vector.broadcast %45 : vector<8x1xi32> to vector<8x128xi32>
    %47 = arith.cmpi eq, %46, %1 : vector<8x128xi32>
    %48 = arith.extui %47 : vector<8x128xi1> to vector<8x128xi32>
    %49 = arith.sitofp %48 : vector<8x128xi32> to vector<8x128xf32>
    %50 = arith.addf %44, %49 : vector<8x128xf32>
    %c0_1 = arith.constant 0 : index
    %c0_2 = arith.constant 0 : index
    %51 = vector.load %arg6[%c0_1, %c0_2] : memref<8x128xf32, #tpu.memory_space<vmem>>, vector<1x128xf32>
    %c1 = arith.constant 1 : index
    %c0_3 = arith.constant 0 : index
    %52 = vector.load %arg6[%c1, %c0_3] : memref<8x128xf32, #tpu.memory_space<vmem>>, vector<1x128xf32>
    %c2 = arith.constant 2 : index
    %c0_4 = arith.constant 0 : index
    %53 = vector.load %arg6[%c2, %c0_4] : memref<8x128xf32, #tpu.memory_space<vmem>>, vector<1x128xf32>
    %c0_5 = arith.constant 0 : index
    %c0_6 = arith.constant 0 : index
    %54 = vector.load %arg2[%c0_5, %c0_6] : memref<128x128xf32, #tpu.memory_space<vmem>>, vector<128x128xf32>
    %cst_7 = arith.constant dense<0.000000e+00> : vector<8x128xf32>
    %55 = tpu.matmul %50, %54, %cst_7 {dimension_numbers = #tpu.dot_dimension_numbers<[1], [0], [0], [1], [0, 0, 1, 1], [], []>} : vector<8x128xf32>, vector<128x128xf32>, vector<8x128xf32> -> vector<8x128xf32>
    %c0_8 = arith.constant 0 : index
    %c0_9 = arith.constant 0 : index
    %56 = vector.load %arg3[%c0_8, %c0_9] : memref<128x128xf32, #tpu.memory_space<vmem>>, vector<128x128xf32>
    %cst_10 = arith.constant dense<0.000000e+00> : vector<8x128xf32>
    %57 = tpu.matmul %55, %56, %cst_10 {dimension_numbers = #tpu.dot_dimension_numbers<[1], [0], [0], [1], [0, 0, 1, 1], [], []>} : vector<8x128xf32>, vector<128x128xf32>, vector<8x128xf32> -> vector<8x128xf32>
    %58 = vector.broadcast %51 : vector<1x128xf32> to vector<8x128xf32>
    %59 = arith.addf %57, %58 : vector<8x128xf32>
    %60 = math.tanh %59 : vector<8x128xf32>
    %c0_11 = arith.constant 0 : index
    %c0_12 = arith.constant 0 : index
    %61 = vector.load %arg4[%c0_11, %c0_12] : memref<128x128xf32, #tpu.memory_space<vmem>>, vector<128x128xf32>
    %cst_13 = arith.constant dense<0.000000e+00> : vector<8x128xf32>
    %62 = tpu.matmul %60, %61, %cst_13 {dimension_numbers = #tpu.dot_dimension_numbers<[1], [0], [0], [1], [0, 0, 1, 1], [], []>} : vector<8x128xf32>, vector<128x128xf32>, vector<8x128xf32> -> vector<8x128xf32>
    %63 = vector.broadcast %52 : vector<1x128xf32> to vector<8x128xf32>
    %64 = arith.addf %62, %63 : vector<8x128xf32>
    %65 = math.tanh %64 : vector<8x128xf32>
    %c0_14 = arith.constant 0 : index
    %c0_15 = arith.constant 0 : index
    %66 = vector.load %arg5[%c0_14, %c0_15] : memref<128x128xf32, #tpu.memory_space<vmem>>, vector<128x128xf32>
    %cst_16 = arith.constant dense<0.000000e+00> : vector<8x128xf32>
    %67 = tpu.matmul %65, %66, %cst_16 {dimension_numbers = #tpu.dot_dimension_numbers<[1], [0], [0], [1], [0, 0, 1, 1], [], []>} : vector<8x128xf32>, vector<128x128xf32>, vector<8x128xf32> -> vector<8x128xf32>
    %68 = vector.broadcast %53 : vector<1x128xf32> to vector<8x128xf32>
    %69 = arith.addf %67, %68 : vector<8x128xf32>
    %c0_17 = arith.constant 0 : index
    %c0_18 = arith.constant 0 : index
    %70 = vector.load %arg7[%c0_17, %c0_18] : memref<8x128xf32, #tpu.memory_space<vmem>>, vector<8x128xf32>
    tpu.vector_store %arg7[%c0_17, %c0_18], %69 {strides = array<i32>} : memref<8x128xf32, #tpu.memory_space<vmem>>, vector<8x128xf32>,
    return
  }
  func.func @transform_0(%arg0: i32) -> (i32, i32) {
    %c0_i32 = arith.constant 0 : i32
    %c0_i32_0 = arith.constant 0 : i32
    return %arg0, %c0_i32 : i32, i32
  }
  func.func @transform_1(%arg0: i32) -> (i32, i32) {
    %c0_i32 = arith.constant 0 : i32
    %c0_i32_0 = arith.constant 0 : i32
    %c0_i32_1 = arith.constant 0 : i32
    return %c0_i32, %c0_i32_0 : i32, i32
  }
  func.func @transform_2(%arg0: i32) -> (i32, i32) {
    %c0_i32 = arith.constant 0 : i32
    %c0_i32_0 = arith.constant 0 : i32
    %c0_i32_1 = arith.constant 0 : i32
    return %c0_i32, %c0_i32_0 : i32, i32
  }
  func.func @transform_3(%arg0: i32) -> (i32, i32) {
    %c0_i32 = arith.constant 0 : i32
    %c0_i32_0 = arith.constant 0 : i32
    %c0_i32_1 = arith.constant 0 : i32
    return %c0_i32, %c0_i32_0 : i32, i32
  }
  func.func @transform_4(%arg0: i32) -> (i32, i32) {
    %c0_i32 = arith.constant 0 : i32
    %c0_i32_0 = arith.constant 0 : i32
    %c0_i32_1 = arith.constant 0 : i32
    return %c0_i32, %c0_i32_0 : i32, i32
  }
  func.func @transform_5(%arg0: i32) -> (i32, i32) {
    %c0_i32 = arith.constant 0 : i32
    %c0_i32_0 = arith.constant 0 : i32
    %c0_i32_1 = arith.constant 0 : i32
    return %c0_i32, %c0_i32_0 : i32, i32
  }
  func.func @transform_6(%arg0: i32) -> (i32, i32) {
    %c0_i32 = arith.constant 0 : i32
    %c0_i32_0 = arith.constant 0 : i32
    return %arg0, %c0_i32 : i32, i32
  }
}

</mosaic_0001>

<llo_original>
// kernel: tpu_custom_call.1
$region0: #{tpu_custom_call.1}
  #allocation0 [shape = 'u32[]', space=smem, size = 0x4, offset = 0x4, fixed_abs, tag = 'smem constant byte address 0x4 - core index']
  #allocation1 [shape = 'u32[144,128]{1,0:T(1,128)}', space=vmem, size = 0x12000, scoped, tag = 'internal scratch']
  %s0 = inlined_call_operand.hbm [shape: s32[8,8], index: 0, kind: input, shape index: {}]
  %s1 = inlined_call_operand.hbm [shape: f32[128,128], index: 1, kind: input, shape index: {}]
  %s2 = inlined_call_operand.hbm [shape: f32[128,128], index: 2, kind: input, shape index: {}]
  %s3 = inlined_call_operand.hbm [shape: f32[128,128], index: 3, kind: input, shape index: {}]
  %s4 = inlined_call_operand.hbm [shape: f32[128,128], index: 4, kind: input, shape index: {}]
  %s5 = inlined_call_operand.vmem [shape: f32[8,128], index: 5, kind: input, shape index: {}]
  %s6 = inlined_call_operand.hbm [shape: f32[8,128], index: 6, kind: output, shape index: {}]
  %s7 = sld [smem:[#allocation0]]
  $region54: #{tpu_custom_call.1} parent=0
    _
  %s9 = ssub.s32 1, %s7
  %s10 = scalar_select 0, %s9, %s7
  $region1: #{tpu_custom_call.1} parent=0
    #allocation2 [shape = 'u8[4096]{0}', space=vmem, size = 0x1000, scoped, tag = 'input window, operand 0, single buffered']
    #allocation3 [shape = 's32[1]{0}', space=sflag, size = 0x4, scoped, tag = 'scoped memory for tpu_custom_call.1']
    #allocation4 [shape = 's32[1]{0}', space=sflag, size = 0x4, scoped, tag = 'scoped memory for tpu_custom_call.1']
    #allocation5 [shape = 'u8[65536]{0}', space=vmem, size = 0x10000, scoped, tag = 'input window, operand 1, single buffered']
    #allocation6 [shape = 's32[1]{0}', space=sflag, size = 0x4, scoped, tag = 'scoped memory for tpu_custom_call.1']
    #allocation7 [shape = 'u8[65536]{0}', space=vmem, size = 0x10000, scoped, tag = 'input window, operand 2, single buffered']
    #allocation8 [shape = 'u8[65536]{0}', space=vmem, size = 0x10000, scoped, tag = 'input window, operand 3, single buffered']
    #allocation9 [shape = 's32[1]{0}', space=sflag, size = 0x4, scoped, tag = 'scoped memory for tpu_custom_call.1']
    #allocation10 [shape = 'u8[65536]{0}', space=vmem, size = 0x10000, scoped, tag = 'input window, operand 4, single buffered']
    #allocation11 [shape = 'u8[4096]{0}', space=vmem, size = 0x1000, scoped, tag = 'output window, operand 0, single buffered']
    %11 = vsyncpa [#allocation3], 0
    %12 = vsyncpa [#allocation6], 0
    %13 = vsyncpa [#allocation9], 0
    %14 = vsyncpa [#allocation4], 0
    // Predicated region
    $region2: #{tpu_custom_call.1} parent=1 // pred_check
      _
    $region3: #{tpu_custom_call.1} parent=1 // pred_check_branch
      %16 = sbr.rel (0) target = $region5
    $region4: #{tpu_custom_call.1} parent=1 // pred_region
      %s18 = ssub.s32 128, 128
      %19 = vsyncadd [#allocation3], %s18
      %s21 = sshll.u32 [#allocation2], 4
      %s22 = int_to_ptr.vmem [resolvable:$true] %s21
      %24 = dma.hbm_to_vmem [thread:$0]  %s0, 128, %s22, [#allocation3]
    $region5: #{tpu_custom_call.1} parent=1 // pred_fallthru
      _
    // Predicated region
    $region6: #{tpu_custom_call.1} parent=1 // pred_check
      _
    $region7: #{tpu_custom_call.1} parent=1 // pred_check_branch
      %26 = sbr.rel (0) target = $region9
    $region8: #{tpu_custom_call.1} parent=1 // pred_region
      %s28 = ssub.s32 2048, 2048
      %29 = vsyncadd [#allocation6], %s28
      %s30 = sshll.u32 [#allocation5], 4
      %s31 = int_to_ptr.vmem [resolvable:$true] %s30
      %36 = dma.hbm_to_vmem [thread:$0]  %s1, 2048, %s31, [#allocation6], 128, 128, 8
    $region9: #{tpu_custom_call.1} parent=1 // pred_fallthru
      _
    // Predicated region
    $region10: #{tpu_custom_call.1} parent=1 // pred_check
      _
    $region11: #{tpu_custom_call.1} parent=1 // pred_check_branch
      %38 = sbr.rel (0) target = $region13
    $region12: #{tpu_custom_call.1} parent=1 // pred_region
      %s40 = ssub.s32 2048, 2048
      %41 = vsyncadd [#allocation6], %s40
      %s42 = sshll.u32 [#allocation7], 4
      %s43 = int_to_ptr.vmem [resolvable:$true] %s42
      %48 = dma.hbm_to_vmem [thread:$0]  %s2, 2048, %s43, [#allocation6], 128, 128, 8
    $region13: #{tpu_custom_call.1} parent=1 // pred_fallthru
      _
    // Predicated region
    $region14: #{tpu_custom_call.1} parent=1 // pred_check
      _
    $region15: #{tpu_custom_call.1} parent=1 // pred_check_branch
      %50 = sbr.rel (0) target = $region17
    $region16: #{tpu_custom_call.1} parent=1 // pred_region
      %s52 = ssub.s32 2048, 2048
      %53 = vsyncadd [#allocation9], %s52
      %s54 = sshll.u32 [#allocation8], 4
      %s55 = int_to_ptr.vmem [resolvable:$true] %s54
      %60 = dma.hbm_to_vmem [thread:$0]  %s3, 2048, %s55, [#allocation9], 128, 128, 8
    $region17: #{tpu_custom_call.1} parent=1 // pred_fallthru
      _
    // Predicated region
    $region18: #{tpu_custom_call.1} parent=1 // pred_check
      _
    $region19: #{tpu_custom_call.1} parent=1 // pred_check_branch
      %62 = sbr.rel (0) target = $region21
    $region20: #{tpu_custom_call.1} parent=1 // pred_region
      %s64 = ssub.s32 2048, 2048
      %65 = vsyncadd [#allocation9], %s64
      %s66 = sshll.u32 [#allocation10], 4
      %s67 = int_to_ptr.vmem [resolvable:$true] %s66
      %72 = dma.hbm_to_vmem [thread:$0]  %s4, 2048, %s67, [#allocation9], 128, 128, 8
    $region21: #{tpu_custom_call.1} parent=1 // pred_fallthru
      _
    // Predicated region
    $region22: #{tpu_custom_call.1} parent=1 // pred_check
      _
    $region23: #{tpu_custom_call.1} parent=1 // pred_check_branch
      %74 = sbr.rel (0) target = $region25
    $region24: #{tpu_custom_call.1} parent=1 // pred_region
      _
    $region25: #{tpu_custom_call.1} parent=1 // pred_fallthru
      _
    // Predicated region
    $region26: #{tpu_custom_call.1} parent=1 // pred_check
      _
    $region27: #{tpu_custom_call.1} parent=1 // pred_check_branch
      %76 = sbr.rel (0) target = $region29
    $region28: #{tpu_custom_call.1} parent=1 // pred_region
      %77 = dma.done [#allocation3], 128
    $region29: #{tpu_custom_call.1} parent=1 // pred_fallthru
      _
    // Predicated region
    $region30: #{tpu_custom_call.1} parent=1 // pred_check
      _
    $region31: #{tpu_custom_call.1} parent=1 // pred_check_branch
      %79 = sbr.rel (0) target = $region33
    $region32: #{tpu_custom_call.1} parent=1 // pred_region
      %80 = dma.done [#allocation6], 2048
    $region33: #{tpu_custom_call.1} parent=1 // pred_fallthru
      _
    // Predicated region
    $region34: #{tpu_custom_call.1} parent=1 // pred_check
      _
    $region35: #{tpu_custom_call.1} parent=1 // pred_check_branch
      %82 = sbr.rel (0) target = $region37
    $region36: #{tpu_custom_call.1} parent=1 // pred_region
      %83 = dma.done [#allocation6], 2048
    $region37: #{tpu_custom_call.1} parent=1 // pred_fallthru
      _
    // Predicated region
    $region38: #{tpu_custom_call.1} parent=1 // pred_check
      _
    $region39: #{tpu_custom_call.1} parent=1 // pred_check_branch
      %85 = sbr.rel (0) target = $region41
    $region40: #{tpu_custom_call.1} parent=1 // pred_region
      %86 = dma.done [#allocation9], 2048
    $region41: #{tpu_custom_call.1} parent=1 // pred_fallthru
      _
    // Predicated region
    $region42: #{tpu_custom_call.1} parent=1 // pred_check
      _
    $region43: #{tpu_custom_call.1} parent=1 // pred_check_branch
      %88 = sbr.rel (0) target = $region45
    $region44: #{tpu_custom_call.1} parent=1 // pred_region
      %89 = dma.done [#allocation9], 2048
    $region45: #{tpu_custom_call.1} parent=1 // pred_fallthru
      _
    %v90 = vld [vmem:[#allocation2] sm:$0xff]
    %v91 = vlaneseq
    %v92 = vand.u32 %v91, 127
    %93 = vset.pattern.permute.xlu0 0
    %94 = vperm.xlu0 %93, %v90
    %v95 = vpop.permute.xlu0 %94
    %vm96 = vcmp.eq.s32.totalorder %v95, %v92
    %v97 = vsel %vm96, 1, 0
    %v98 = vcvt.s32.f32 %v97
    %v99 = vadd.f32 %v98, 0.0
    %100 = vset.pattern.permute.xlu0 1
    %101 = vperm.xlu0 %100, %v90
    %v102 = vpop.permute.xlu0 %101
    %vm103 = vcmp.eq.s32.totalorder %v102, %v92
    %v104 = vsel %vm103, 1, 0
    %v105 = vcvt.s32.f32 %v104
    %v106 = vadd.f32 %v99, %v105
    %107 = vset.pattern.permute.xlu0 2
    %108 = vperm.xlu0 %107, %v90
    %v109 = vpop.permute.xlu0 %108
    %vm110 = vcmp.eq.s32.totalorder %v109, %v92
    %v111 = vsel %vm110, 1, 0
    %v112 = vcvt.s32.f32 %v111
    %v113 = vadd.f32 %v106, %v112
    %114 = vset.pattern.permute.xlu0 3
    %115 = vperm.xlu0 %114, %v90
    %v116 = vpop.permute.xlu0 %115
    %vm117 = vcmp.eq.s32.totalorder %v116, %v92
    %v118 = vsel %vm117, 1, 0
    %v119 = vcvt.s32.f32 %v118
    %v120 = vadd.f32 %v113, %v119
    %121 = vset.pattern.permute.xlu0 4
    %122 = vperm.xlu0 %121, %v90
    %v123 = vpop.permute.xlu0 %122
    %vm124 = vcmp.eq.s32.totalorder %v123, %v92
    %v125 = vsel %vm124, 1, 0
    %v126 = vcvt.s32.f32 %v125
    %v127 = vadd.f32 %v120, %v126
    %128 = vset.pattern.permute.xlu0 5
    %129 = vperm.xlu0 %128, %v90
    %v130 = vpop.permute.xlu0 %129
    %vm131 = vcmp.eq.s32.totalorder %v130, %v92
    %v132 = vsel %vm131, 1, 0
    %v133 = vcvt.s32.f32 %v132
    %v134 = vadd.f32 %v127, %v133
    %135 = vset.pattern.permute.xlu0 6
    %136 = vperm.xlu0 %135, %v90
    %v137 = vpop.permute.xlu0 %136
    %vm138 = vcmp.eq.s32.totalorder %v137, %v92
    %v139 = vsel %vm138, 1, 0
    %v140 = vcvt.s32.f32 %v139
    %v141 = vadd.f32 %v134, %v140
    %142 = vset.pattern.permute.xlu0 7
    %143 = vperm.xlu0 %142, %v90
    %v144 = vpop.permute.xlu0 %143
    %vm145 = vcmp.eq.s32.totalorder %v144, %v92
    %v146 = vsel %vm145, 1, 0
    %v147 = vcvt.s32.f32 %v146
    %v148 = vadd.f32 %v141, %v147
    %v149 = vld [vmem:[%s5] sm:$0x1]
    %v150 = vld [vmem:[%s5 + $0x1] sm:$0x1]
    %v151 = vld [vmem:[%s5 + $0x2] sm:$0x1]
    %v152 = vld [vmem:[#allocation5] sm:$0xff]
    %v153 = vld [vmem:[#allocation5 + $0x8] sm:$0xff]
    %v154 = vld [vmem:[#allocation5 + $0x10] sm:$0xff]
    %v155 = vld [vmem:[#allocation5 + $0x18] sm:$0xff]
    %v156 = vld [vmem:[#allocation5 + $0x20] sm:$0xff]
    %v157 = vld [vmem:[#allocation5 + $0x28] sm:$0xff]
    %v158 = vld [vmem:[#allocation5 + $0x30] sm:$0xff]
    %v159 = vld [vmem:[#allocation5 + $0x38] sm:$0xff]
    %v160 = vld [vmem:[#allocation5 + $0x40] sm:$0xff]
    %v161 = vld [vmem:[#allocation5 + $0x48] sm:$0xff]
    %v162 = vld [vmem:[#allocation5 + $0x50] sm:$0xff]
    %v163 = vld [vmem:[#allocation5 + $0x58] sm:$0xff]
    %v164 = vld [vmem:[#allocation5 + $0x60] sm:$0xff]
    %v165 = vld [vmem:[#allocation5 + $0x68] sm:$0xff]
    %v166 = vld [vmem:[#allocation5 + $0x70] sm:$0xff]
    %v167 = vld [vmem:[#allocation5 + $0x78] sm:$0xff]
    %168 = vmatprep.subr.mxu0 0.0
    %169 = vmatpush1.msra.mxu0 %v152
    %170 = vmatprep.subr.mxu0 0.0
    %171 = vmatpush1.msra.mxu0 %v153
    %172 = vmatprep.subr.mxu0 0.0
    %173 = vmatpush1.msra.mxu0 %v154
    %174 = vmatprep.subr.mxu0 0.0
    %175 = vmatpush1.msra.mxu0 %v155
    %176 = vmatprep.subr.mxu0 0.0
    %177 = vmatpush1.msra.mxu0 %v156
    %178 = vmatprep.subr.mxu0 0.0
    %179 = vmatpush1.msra.mxu0 %v157
    %180 = vmatprep.subr.mxu0 0.0
    %181 = vmatpush1.msra.mxu0 %v158
    %182 = vmatprep.subr.mxu0 0.0
    %183 = vmatpush1.msra.mxu0 %v159
    %184 = vmatprep.subr.mxu0 0.0
    %185 = vmatpush1.msra.mxu0 %v160
    %186 = vmatprep.subr.mxu0 0.0
    %187 = vmatpush1.msra.mxu0 %v161
    %188 = vmatprep.subr.mxu0 0.0
    %189 = vmatpush1.msra.mxu0 %v162
    %190 = vmatprep.subr.mxu0 0.0
    %191 = vmatpush1.msra.mxu0 %v163
    %192 = vmatprep.subr.mxu0 0.0
    %193 = vmatpush1.msra.mxu0 %v164
    %194 = vmatprep.subr.mxu0 0.0
    %195 = vmatpush1.msra.mxu0 %v165
    %196 = vmatprep.subr.mxu0 0.0
    %197 = vmatpush1.msra.mxu0 %v166
    %198 = vmatprep.subr.mxu0 0.0
    %199 = vmatpush1.msra.mxu0 %v167
    %200 = vmatprep.subr.mxu0 0.0
    %201 = vmatpush1.msra.mxu0 0.0
    %202 = vmatprep.subr.mxu0 0.0
    %203 = vmatpush1.msra.mxu0 0.0
    %204 = vmatprep.subr.mxu0 0.0
    %205 = vmatpush1.msra.mxu0 0.0
    %206 = vmatprep.subr.mxu0 0.0
    %207 = vmatpush1.msra.mxu0 0.0
    %208 = vmatprep.subr.mxu0 0.0
    %209 = vmatpush1.msra.mxu0 0.0
    %210 = vmatprep.subr.mxu0 0.0
    %211 = vmatpush1.msra.mxu0 0.0
    %212 = vmatprep.subr.mxu0 0.0
    %213 = vmatpush1.msra.mxu0 0.0
    %214 = vmatprep.subr.mxu0 0.0
    %215 = vmatpush1.msra.mxu0 0.0
    %216 = vmatprep.subr.mxu0 0.0
    %217 = vmatpush1.msra.mxu0 0.0
    %218 = vmatprep.subr.mxu0 0.0
    %219 = vmatpush1.msra.mxu0 0.0
    %220 = vmatprep.subr.mxu0 0.0
    %221 = vmatpush1.msra.mxu0 0.0
    %222 = vmatprep.subr.mxu0 0.0
    %223 = vmatpush1.msra.mxu0 0.0
    %224 = vmatprep.subr.mxu0 0.0
    %225 = vmatpush1.msra.mxu0 0.0
    %226 = vmatprep.subr.mxu0 0.0
    %227 = vmatpush1.msra.mxu0 0.0
    %228 = vmatprep.subr.mxu0 0.0
    %229 = vmatpush1.msra.mxu0 0.0
    %230 = vmatprep.subr.mxu0 0.0
    %231 = vmatpush1.msra.mxu0 0.0
    %232 = vmatprep.mubr.f32.mxu0 0.0
    %233 = vmatmul.mubr.f32.gmra.mrb[0].mxu0 %v148
    %v234 = vpop.f32.mrb[0].mxu0
    %v235 = vadd.f32 0.0, %v234
    %v236 = vpop.f32.mrb[0].mxu0
    %237 = vdwg.mxu0
    %v238 = vld [vmem:[#allocation7] sm:$0xff]
    %v239 = vld [vmem:[#allocation7 + $0x8] sm:$0xff]
    %v240 = vld [vmem:[#allocation7 + $0x10] sm:$0xff]
    %v241 = vld [vmem:[#allocation7 + $0x18] sm:$0xff]
    %v242 = vld [vmem:[#allocation7 + $0x20] sm:$0xff]
    %v243 = vld [vmem:[#allocation7 + $0x28] sm:$0xff]
    %v244 = vld [vmem:[#allocation7 + $0x30] sm:$0xff]
    %v245 = vld [vmem:[#allocation7 + $0x38] sm:$0xff]
    %v246 = vld [vmem:[#allocation7 + $0x40] sm:$0xff]
    %v247 = vld [vmem:[#allocation7 + $0x48] sm:$0xff]
    %v248 = vld [vmem:[#allocation7 + $0x50] sm:$0xff]
    %v249 = vld [vmem:[#allocation7 + $0x58] sm:$0xff]
    %v250 = vld [vmem:[#allocation7 + $0x60] sm:$0xff]
    %v251 = vld [vmem:[#allocation7 + $0x68] sm:$0xff]
    %v252 = vld [vmem:[#allocation7 + $0x70] sm:$0xff]
    %v253 = vld [vmem:[#allocation7 + $0x78] sm:$0xff]
    %v254 = vlaneseq
    %v255 = vshrl.u32 %v254, 7
    %v256 = vsub.s32 0, %v255
    %v257 = vrot.slane %v149, %v256
    %258 = vmatprep.subr.mxu0 0.0
    %259 = vmatpush1.msra.mxu0 %v238
    %260 = vmatprep.subr.mxu0 0.0
    %261 = vmatpush1.msra.mxu0 %v239
    %262 = vmatprep.subr.mxu0 0.0
    %263 = vmatpush1.msra.mxu0 %v240
    %264 = vmatprep.subr.mxu0 0.0
    %265 = vmatpush1.msra.mxu0 %v241
    %266 = vmatprep.subr.mxu0 0.0
    %267 = vmatpush1.msra.mxu0 %v242
    %268 = vmatprep.subr.mxu0 0.0
    %269 = vmatpush1.msra.mxu0 %v243
    %270 = vmatprep.subr.mxu0 0.0
    %271 = vmatpush1.msra.mxu0 %v244
    %272 = vmatprep.subr.mxu0 0.0
    %273 = vmatpush1.msra.mxu0 %v245
    %274 = vmatprep.subr.mxu0 0.0
    %275 = vmatpush1.msra.mxu0 %v246
    %276 = vmatprep.subr.mxu0 0.0
    %277 = vmatpush1.msra.mxu0 %v247
    %278 = vmatprep.subr.mxu0 0.0
    %279 = vmatpush1.msra.mxu0 %v248
    %280 = vmatprep.subr.mxu0 0.0
    %281 = vmatpush1.msra.mxu0 %v249
    %282 = vmatprep.subr.mxu0 0.0
    %283 = vmatpush1.msra.mxu0 %v250
    %284 = vmatprep.subr.mxu0 0.0
    %285 = vmatpush1.msra.mxu0 %v251
    %286 = vmatprep.subr.mxu0 0.0
    %287 = vmatpush1.msra.mxu0 %v252
    %288 = vmatprep.subr.mxu0 0.0
    %289 = vmatpush1.msra.mxu0 %v253
    %290 = vmatprep.subr.mxu0 0.0
    %291 = vmatpush1.msra.mxu0 0.0
    %292 = vmatprep.subr.mxu0 0.0
    %293 = vmatpush1.msra.mxu0 0.0
    %294 = vmatprep.subr.mxu0 0.0
    %295 = vmatpush1.msra.mxu0 0.0
    %296 = vmatprep.subr.mxu0 0.0
    %297 = vmatpush1.msra.mxu0 0.0
    %298 = vmatprep.subr.mxu0 0.0
    %299 = vmatpush1.msra.mxu0 0.0
    %300 = vmatprep.subr.mxu0 0.0
    %301 = vmatpush1.msra.mxu0 0.0
    %302 = vmatprep.subr.mxu0 0.0
    %303 = vmatpush1.msra.mxu0 0.0
    %304 = vmatprep.subr.mxu0 0.0
    %305 = vmatpush1.msra.mxu0 0.0
    %306 = vmatprep.subr.mxu0 0.0
    %307 = vmatpush1.msra.mxu0 0.0
    %308 = vmatprep.subr.mxu0 0.0
    %309 = vmatpush1.msra.mxu0 0.0
    %310 = vmatprep.subr.mxu0 0.0
    %311 = vmatpush1.msra.mxu0 0.0
    %312 = vmatprep.subr.mxu0 0.0
    %313 = vmatpush1.msra.mxu0 0.0
    %314 = vmatprep.subr.mxu0 0.0
    %315 = vmatpush1.msra.mxu0 0.0
    %316 = vmatprep.subr.mxu0 0.0
    %317 = vmatpush1.msra.mxu0 0.0
    %318 = vmatprep.subr.mxu0 0.0
    %319 = vmatpush1.msra.mxu0 0.0
    %320 = vmatprep.subr.mxu0 0.0
    %321 = vmatpush1.msra.mxu0 0.0
    %322 = vmatprep.mubr.f32.mxu0 0.0
    %323 = vmatmul.mubr.f32.gmra.mrb[0].mxu0 %v235
    %v324 = vpop.f32.mrb[0].mxu0
    %v325 = vadd.f32 %v257, %v324
    %v326 = vpop.f32.mrb[0].mxu0
    %327 = vdwg.mxu0
    %v328 = vtanh.pop %v325
    %v329 = vld [vmem:[#allocation8] sm:$0xff]
    %v330 = vld [vmem:[#allocation8 + $0x8] sm:$0xff]
    %v331 = vld [vmem:[#allocation8 + $0x10] sm:$0xff]
    %v332 = vld [vmem:[#allocation8 + $0x18] sm:$0xff]
    %v333 = vld [vmem:[#allocation8 + $0x20] sm:$0xff]
    %v334 = vld [vmem:[#allocation8 + $0x28] sm:$0xff]
    %v335 = vld [vmem:[#allocation8 + $0x30] sm:$0xff]
    %v336 = vld [vmem:[#allocation8 + $0x38] sm:$0xff]
    %v337 = vld [vmem:[#allocation8 + $0x40] sm:$0xff]
    %v338 = vld [vmem:[#allocation8 + $0x48] sm:$0xff]
    %v339 = vld [vmem:[#allocation8 + $0x50] sm:$0xff]
    %v340 = vld [vmem:[#allocation8 + $0x58] sm:$0xff]
    %v341 = vld [vmem:[#allocation8 + $0x60] sm:$0xff]
    %v342 = vld [vmem:[#allocation8 + $0x68] sm:$0xff]
    %v343 = vld [vmem:[#allocation8 + $0x70] sm:$0xff]
    %v344 = vld [vmem:[#allocation8 + $0x78] sm:$0xff]
    %v345 = vlaneseq
    %v346 = vshrl.u32 %v345, 7
    %v347 = vsub.s32 0, %v346
    %v348 = vrot.slane %v150, %v347
    %349 = vmatprep.subr.mxu0 0.0
    %350 = vmatpush1.msra.mxu0 %v329
    %351 = vmatprep.subr.mxu0 0.0
    %352 = vmatpush1.msra.mxu0 %v330
    %353 = vmatprep.subr.mxu0 0.0
    %354 = vmatpush1.msra.mxu0 %v331
    %355 = vmatprep.subr.mxu0 0.0
    %356 = vmatpush1.msra.mxu0 %v332
    %357 = vmatprep.subr.mxu0 0.0
    %358 = vmatpush1.msra.mxu0 %v333
    %359 = vmatprep.subr.mxu0 0.0
    %360 = vmatpush1.msra.mxu0 %v334
    %361 = vmatprep.subr.mxu0 0.0
    %362 = vmatpush1.msra.mxu0 %v335
    %363 = vmatprep.subr.mxu0 0.0
    %364 = vmatpush1.msra.mxu0 %v336
    %365 = vmatprep.subr.mxu0 0.0
    %366 = vmatpush1.msra.mxu0 %v337
    %367 = vmatprep.subr.mxu0 0.0
    %368 = vmatpush1.msra.mxu0 %v338
    %369 = vmatprep.subr.mxu0 0.0
    %370 = vmatpush1.msra.mxu0 %v339
    %371 = vmatprep.subr.mxu0 0.0
    %372 = vmatpush1.msra.mxu0 %v340
    %373 = vmatprep.subr.mxu0 0.0
    %374 = vmatpush1.msra.mxu0 %v341
    %375 = vmatprep.subr.mxu0 0.0
    %376 = vmatpush1.msra.mxu0 %v342
    %377 = vmatprep.subr.mxu0 0.0
    %378 = vmatpush1.msra.mxu0 %v343
    %379 = vmatprep.subr.mxu0 0.0
    %380 = vmatpush1.msra.mxu0 %v344
    %381 = vmatprep.subr.mxu0 0.0
    %382 = vmatpush1.msra.mxu0 0.0
    %383 = vmatprep.subr.mxu0 0.0
    %384 = vmatpush1.msra.mxu0 0.0
    %385 = vmatprep.subr.mxu0 0.0
    %386 = vmatpush1.msra.mxu0 0.0
    %387 = vmatprep.subr.mxu0 0.0
    %388 = vmatpush1.msra.mxu0 0.0
    %389 = vmatprep.subr.mxu0 0.0
    %390 = vmatpush1.msra.mxu0 0.0
    %391 = vmatprep.subr.mxu0 0.0
    %392 = vmatpush1.msra.mxu0 0.0
    %393 = vmatprep.subr.mxu0 0.0
    %394 = vmatpush1.msra.mxu0 0.0
    %395 = vmatprep.subr.mxu0 0.0
    %396 = vmatpush1.msra.mxu0 0.0
    %397 = vmatprep.subr.mxu0 0.0
    %398 = vmatpush1.msra.mxu0 0.0
    %399 = vmatprep.subr.mxu0 0.0
    %400 = vmatpush1.msra.mxu0 0.0
    %401 = vmatprep.subr.mxu0 0.0
    %402 = vmatpush1.msra.mxu0 0.0
    %403 = vmatprep.subr.mxu0 0.0
    %404 = vmatpush1.msra.mxu0 0.0
    %405 = vmatprep.subr.mxu0 0.0
    %406 = vmatpush1.msra.mxu0 0.0
    %407 = vmatprep.subr.mxu0 0.0
    %408 = vmatpush1.msra.mxu0 0.0
    %409 = vmatprep.subr.mxu0 0.0
    %410 = vmatpush1.msra.mxu0 0.0
    %411 = vmatprep.subr.mxu0 0.0
    %412 = vmatpush1.msra.mxu0 0.0
    %413 = vmatprep.mubr.f32.mxu0 0.0
    %414 = vmatmul.mubr.f32.gmra.mrb[0].mxu0 %v328
    %v415 = vpop.f32.mrb[0].mxu0
    %v416 = vadd.f32 %v348, %v415
    %v417 = vpop.f32.mrb[0].mxu0
    %418 = vdwg.mxu0
    %v419 = vtanh.pop %v416
    %v420 = vld [vmem:[#allocation10] sm:$0xff]
    %v421 = vld [vmem:[#allocation10 + $0x8] sm:$0xff]
    %v422 = vld [vmem:[#allocation10 + $0x10] sm:$0xff]
    %v423 = vld [vmem:[#allocation10 + $0x18] sm:$0xff]
    %v424 = vld [vmem:[#allocation10 + $0x20] sm:$0xff]
    %v425 = vld [vmem:[#allocation10 + $0x28] sm:$0xff]
    %v426 = vld [vmem:[#allocation10 + $0x30] sm:$0xff]
    %v427 = vld [vmem:[#allocation10 + $0x38] sm:$0xff]
    %v428 = vld [vmem:[#allocation10 + $0x40] sm:$0xff]
    %v429 = vld [vmem:[#allocation10 + $0x48] sm:$0xff]
    %v430 = vld [vmem:[#allocation10 + $0x50] sm:$0xff]
    %v431 = vld [vmem:[#allocation10 + $0x58] sm:$0xff]
    %v432 = vld [vmem:[#allocation10 + $0x60] sm:$0xff]
    %v433 = vld [vmem:[#allocation10 + $0x68] sm:$0xff]
    %v434 = vld [vmem:[#allocation10 + $0x70] sm:$0xff]
    %v435 = vld [vmem:[#allocation10 + $0x78] sm:$0xff]
    %v436 = vlaneseq
    %v437 = vshrl.u32 %v436, 7
    %v438 = vsub.s32 0, %v437
    %v439 = vrot.slane %v151, %v438
    %440 = vmatprep.subr.mxu0 0.0
    %441 = vmatpush1.msra.mxu0 %v420
    %442 = vmatprep.subr.mxu0 0.0
    %443 = vmatpush1.msra.mxu0 %v421
    %444 = vmatprep.subr.mxu0 0.0
    %445 = vmatpush1.msra.mxu0 %v422
    %446 = vmatprep.subr.mxu0 0.0
    %447 = vmatpush1.msra.mxu0 %v423
    %448 = vmatprep.subr.mxu0 0.0
    %449 = vmatpush1.msra.mxu0 %v424
    %450 = vmatprep.subr.mxu0 0.0
    %451 = vmatpush1.msra.mxu0 %v425
    %452 = vmatprep.subr.mxu0 0.0
    %453 = vmatpush1.msra.mxu0 %v426
    %454 = vmatprep.subr.mxu0 0.0
    %455 = vmatpush1.msra.mxu0 %v427
    %456 = vmatprep.subr.mxu0 0.0
    %457 = vmatpush1.msra.mxu0 %v428
    %458 = vmatprep.subr.mxu0 0.0
    %459 = vmatpush1.msra.mxu0 %v429
    %460 = vmatprep.subr.mxu0 0.0
    %461 = vmatpush1.msra.mxu0 %v430
    %462 = vmatprep.subr.mxu0 0.0
    %463 = vmatpush1.msra.mxu0 %v431
    %464 = vmatprep.subr.mxu0 0.0
    %465 = vmatpush1.msra.mxu0 %v432
    %466 = vmatprep.subr.mxu0 0.0
    %467 = vmatpush1.msra.mxu0 %v433
    %468 = vmatprep.subr.mxu0 0.0
    %469 = vmatpush1.msra.mxu0 %v434
    %470 = vmatprep.subr.mxu0 0.0
    %471 = vmatpush1.msra.mxu0 %v435
    %472 = vmatprep.subr.mxu0 0.0
    %473 = vmatpush1.msra.mxu0 0.0
    %474 = vmatprep.subr.mxu0 0.0
    %475 = vmatpush1.msra.mxu0 0.0
    %476 = vmatprep.subr.mxu0 0.0
    %477 = vmatpush1.msra.mxu0 0.0
    %478 = vmatprep.subr.mxu0 0.0
    %479 = vmatpush1.msra.mxu0 0.0
    %480 = vmatprep.subr.mxu0 0.0
    %481 = vmatpush1.msra.mxu0 0.0
    %482 = vmatprep.subr.mxu0 0.0
    %483 = vmatpush1.msra.mxu0 0.0
    %484 = vmatprep.subr.mxu0 0.0
    %485 = vmatpush1.msra.mxu0 0.0
    %486 = vmatprep.subr.mxu0 0.0
    %487 = vmatpush1.msra.mxu0 0.0
    %488 = vmatprep.subr.mxu0 0.0
    %489 = vmatpush1.msra.mxu0 0.0
    %490 = vmatprep.subr.mxu0 0.0
    %491 = vmatpush1.msra.mxu0 0.0
    %492 = vmatprep.subr.mxu0 0.0
    %493 = vmatpush1.msra.mxu0 0.0
    %494 = vmatprep.subr.mxu0 0.0
    %495 = vmatpush1.msra.mxu0 0.0
    %496 = vmatprep.subr.mxu0 0.0
    %497 = vmatpush1.msra.mxu0 0.0
    %498 = vmatprep.subr.mxu0 0.0
    %499 = vmatpush1.msra.mxu0 0.0
    %500 = vmatprep.subr.mxu0 0.0
    %501 = vmatpush1.msra.mxu0 0.0
    %502 = vmatprep.subr.mxu0 0.0
    %503 = vmatpush1.msra.mxu0 0.0
    %504 = vmatprep.mubr.f32.mxu0 0.0
    %505 = vmatmul.mubr.f32.gmra.mrb[0].mxu0 %v419
    %v506 = vpop.f32.mrb[0].mxu0
    %v507 = vadd.f32 %v439, %v506
    %v508 = vpop.f32.mrb[0].mxu0
    %509 = vdwg.mxu0
    %510 = vst [vmem:[#allocation11] sm:$0xff] %v507
    // Predicated region
    $region46: #{tpu_custom_call.1} parent=1 // pred_check
      _
    $region47: #{tpu_custom_call.1} parent=1 // pred_check_branch
      %512 = sbr.rel (0) target = $region49
    $region48: #{tpu_custom_call.1} parent=1 // pred_region
      %s514 = ssub.s32 128, 128
      %515 = vsyncadd [#allocation4], %s514
      %s517 = sshll.u32 [#allocation11], 4
      %s518 = int_to_ptr.vmem [resolvable:$true] %s517
      %520 = dma.vmem_to_hbm [thread:$0]  %s518, 128, %s6, [#allocation4]
    $region49: #{tpu_custom_call.1} parent=1 // pred_fallthru
      _
    // Predicated region
    $region50: #{tpu_custom_call.1} parent=1 // pred_check
      _
    $region51: #{tpu_custom_call.1} parent=1 // pred_check_branch
      %522 = sbr.rel (0) target = $region53
    $region52: #{tpu_custom_call.1} parent=1 // pred_region
      %523 = dma.done [#allocation4], 128
    $region53: #{tpu_custom_call.1} parent=1 // pred_fallthru
      _
    %524 = vsyncpa [#allocation3], 1
    %525 = vsyncpa [#allocation6], 1
    %526 = vsyncpa [#allocation9], 1
    %527 = vsyncpa [#allocation4], 1

</llo_original>
